<compile_context>
chip_gen: v6e
topology: v6e:2x2x1
jax: 0.10.0
libtpu: 0.0.40
codegen_flags: <defaults>
</compile_context>

<pallas_src>
import jax
import jax.numpy as jnp
from jax.experimental import pallas as pl
from jax.experimental.pallas import tpu as pltpu


def _round_up(x, m):
    return (x + m - 1) // m * m


def _mlp_kernel(x_ref, w1_ref, b1_ref, w2_ref, b2_ref, w3_ref, b3_ref, o_ref):
    """Fused 3-layer MLP on one batch tile: relu(relu(x@W1+b1)@W2+b2)@W3+b3.

    x arrives f32 and is cast to bf16 in VMEM; weights are bf16 (native MXU
    inputs); accumulation, bias-add and ReLU are f32; hidden activations are
    re-cast to bf16 before the next MXU pass; the output is stored bf16.
    """
    x = x_ref[...].astype(jnp.bfloat16)  # in-kernel cast (no extra HBM pass)

    h = jnp.dot(x, w1_ref[...], preferred_element_type=jnp.float32) + b1_ref[...]
    h = jnp.maximum(h, 0.0).astype(jnp.bfloat16)

    h = jnp.dot(h, w2_ref[...], preferred_element_type=jnp.float32) + b2_ref[...]
    h = jnp.maximum(h, 0.0).astype(jnp.bfloat16)

    out = jnp.dot(h, w3_ref[...], preferred_element_type=jnp.float32) + b3_ref[...]
    o_ref[...] = out.astype(o_ref.dtype)  # bf16 store (lane-dense, unmasked)


def _choose_batch_tile(B, tile_b):
    """Balanced batch tiles: bounded padding waste, >=2 tiles for mid-size B."""
    n_tiles = pl.cdiv(B, tile_b)
    if B >= 256:
        # Make sure both v7x TensorCores get work under the "parallel" axis.
        n_tiles = max(n_tiles, 2)
    tb = _round_up(pl.cdiv(B, n_tiles), 16)  # 16: packed bf16 sublanes
    B_pad = _round_up(B, tb)
    return tb, B_pad


def mlp_forward(x, params, n_outputs, *, tile_b=512):
    """Net.forward (MLP branch) as a batch-tiled fused Pallas kernel.

    x:         (B, n_inputs) float32
    params:    lane-padded kernel params from init_params()[1]
               w1 (n_in, nh_p) bf16, b1 (1, nh_p) f32,
               w2 (nh_p, nh_p) bf16, b2 (1, nh_p) f32,
               w3 (nh_p, no_p) bf16, b3 (1, no_p) f32
    n_outputs: logical (unpadded) output width

    Returns (B, n_outputs) float32.
    """
    B, n_in = x.shape
    nh_p = params["w1"].shape[1]
    n_out_p = params["w3"].shape[1]

    tb, B_pad = _choose_batch_tile(B, tile_b)
    if B_pad != B:
        x = jnp.pad(x, ((0, B_pad - B), (0, 0)))

    grid = (B_pad // tb,)

    def resident(shape):
        # Constant block index across the batch grid -> DMA'd once, stays in VMEM.
        return pl.BlockSpec(shape, lambda i: (0, 0))

    # --- cost estimate (f32 x in, bf16 weights, bf16 out) ------------------
    flops = 2 * B_pad * (n_in * nh_p + nh_p * nh_p + nh_p * n_out_p)
    w_bytes = (params["w1"].size + params["w2"].size + params["w3"].size) * 2
    b_bytes = (params["b1"].size + params["b2"].size + params["b3"].size) * 4
    bytes_accessed = (
        B_pad * n_in * 4          # x read, f32
        + w_bytes + b_bytes       # weights/biases, read once
        + B_pad * n_out_p * 2     # out write, bf16
    )

    # --- explicit VMEM budget (v7x scoped default is 32 MiB / 64 MiB phys) --
    resident_bytes = w_bytes + b_bytes
    io_tile_bytes = 2 * (tb * n_in * 4 + tb * n_out_p * 2)   # double-buffered x/out
    inter_bytes = 2 * tb * nh_p * (4 + 2)                    # f32+bf16 hidden temps
    footprint = 2 * resident_bytes + io_tile_bytes + inter_bytes
    vmem_limit = int(min(max(2 * footprint, 32 * 1024 * 1024), 64 * 1024 * 1024))

    out = pl.pallas_call(
        _mlp_kernel,
        out_shape=jax.ShapeDtypeStruct((B_pad, n_out_p), jnp.bfloat16),
        grid=grid,
        in_specs=[
            pl.BlockSpec((tb, n_in), lambda i: (i, 0)),         # x: tiled over batch
            resident((n_in, nh_p)), resident((1, nh_p)),        # layer 1 (resident)
            resident((nh_p, nh_p)), resident((1, nh_p)),        # layer 2 (resident)
            resident((nh_p, n_out_p)), resident((1, n_out_p)),  # layer 3 (resident)
        ],
        out_specs=pl.BlockSpec((tb, n_out_p), lambda i: (i, 0)),
        compiler_params=pltpu.CompilerParams(
            dimension_semantics=("parallel",),  # shard batch tiles across TCs (v7x)
            vmem_limit_bytes=vmem_limit,
        ),
        cost_estimate=pl.CostEstimate(
            flops=flops, transcendentals=0, bytes_accessed=bytes_accessed),
    )(x, params["w1"], params["b1"], params["w2"], params["b2"],
      params["w3"], params["b3"])

    # Drop batch padding / lane padding and upcast logits to f32 for the caller.
    return out[:B, :n_outputs].astype(jnp.float32)


def init_params(key, n_inputs, n_hiddens, n_outputs):
    """PyTorch-Linear-style init (uniform +-1/sqrt(fan_in)).

    Returns (logical_f32_params, padded_bf16_kernel_params).  The padded
    version zero-pads hidden and output widths to multiples of 128 (lane-dense,
    native MXU tile on v5e; 256 would be optimal on v6e/v7x only when the
    widths are already large) and stores weights in bf16; zero rows/cols keep
    the computation exact.
    """
    ks = jax.random.split(key, 6)

    def linear(kw, kb, fan_in, fan_out):
        bound = 1.0 / jnp.sqrt(jnp.float32(fan_in))
        w = jax.random.uniform(kw, (fan_in, fan_out), jnp.float32, -bound, bound)
        b = jax.random.uniform(kb, (1, fan_out), jnp.float32, -bound, bound)
        return w, b

    w1, b1 = linear(ks[0], ks[1], n_inputs, n_hiddens)
    w2, b2 = linear(ks[2], ks[3], n_hiddens, n_hiddens)
    w3, b3 = linear(ks[4], ks[5], n_hiddens, n_outputs)
    logical = dict(w1=w1, b1=b1, w2=w2, b2=b2, w3=w3, b3=b3)

    nh_p = _round_up(n_hiddens, 128)
    no_p = _round_up(n_outputs, 128)

    def pad2(a, rows, cols):
        return jnp.pad(a, ((0, rows - a.shape[0]), (0, cols - a.shape[1])))

    padded = dict(
        w1=pad2(w1, n_inputs, nh_p).astype(jnp.bfloat16),
        b1=pad2(b1, 1, nh_p),
        w2=pad2(w2, nh_p, nh_p).astype(jnp.bfloat16),
        b2=pad2(b2, 1, nh_p),
        w3=pad2(w3, nh_p, no_p).astype(jnp.bfloat16),
        b3=pad2(b3, 1, no_p),
    )
    return logical, padded


def reference_forward(x, p):
    h = jnp.maximum(x @ p["w1"] + p["b1"], 0.0)
    h = jnp.maximum(h @ p["w2"] + p["b2"], 0.0)
    return h @ p["w3"] + p["b3"]


if __name__ == "__main__":
    # Small shapes consistent with the module: args.n_layers = 2,
    # args.n_hiddens = 32, n_inputs = 64, n_outputs = 10, batch = 8.
    B, N_IN, N_H, N_OUT = 8, 64, 32, 10

    key = jax.random.PRNGKey(0)
    k_x, k_p = jax.random.split(key)

    x = jax.random.normal(k_x, (B, N_IN), dtype=jnp.float32)
    logical_params, kernel_params = init_params(k_p, N_IN, N_H, N_OUT)

    out = mlp_forward(x, kernel_params, N_OUT)
    out = jax.block_until_ready(out)

    ref = reference_forward(x, logical_params)
    assert out.shape == (B, N_OUT), out.shape
    # bf16 MXU operands + bf16 output vs f32 reference -> loosened tolerance.
    assert jnp.allclose(out, ref, atol=3e-2, rtol=3e-2), "mismatch vs reference"

    print("KERNEL_OK")
</pallas_src>

<mosaic_0001>
module attributes {stable_mosaic.version = 11 : i64} {
  func.func @_mlp_kernel(%arg0: i32, %arg1: memref<16x64xf32, #tpu.memory_space<vmem>>, %arg2: memref<64x128xbf16, #tpu.memory_space<vmem>>, %arg3: memref<1x128xf32, #tpu.memory_space<vmem>>, %arg4: memref<128x128xbf16, #tpu.memory_space<vmem>>, %arg5: memref<1x128xf32, #tpu.memory_space<vmem>>, %arg6: memref<128x128xbf16, #tpu.memory_space<vmem>>, %arg7: memref<1x128xf32, #tpu.memory_space<vmem>>, %arg8: memref<16x128xbf16, #tpu.memory_space<vmem>>) attributes {dimension_semantics = [#tpu.dimension_semantics<parallel>], iteration_bounds = array<i64: 1>, scalar_prefetch = 0 : i64, scratch_operands = 0 : i64, tpu.core_type = #tpu.core_type<tc>, window_params = [{transform_indices = @transform_0, window_bounds = array<i64: 16, 64>}, {pipeline_mode = #tpu.pipeline_mode<synchronous>, transform_indices = @transform_1, window_bounds = array<i64: 64, 128>}, {pipeline_mode = #tpu.pipeline_mode<synchronous>, transform_indices = @transform_2, window_bounds = array<i64: 1, 128>}, {pipeline_mode = #tpu.pipeline_mode<synchronous>, transform_indices = @transform_3, window_bounds = array<i64: 128, 128>}, {pipeline_mode = #tpu.pipeline_mode<synchronous>, transform_indices = @transform_4, window_bounds = array<i64: 1, 128>}, {pipeline_mode = #tpu.pipeline_mode<synchronous>, transform_indices = @transform_5, window_bounds = array<i64: 128, 128>}, {pipeline_mode = #tpu.pipeline_mode<synchronous>, transform_indices = @transform_6, window_bounds = array<i64: 1, 128>}, {transform_indices = @transform_7, window_bounds = array<i64: 16, 128>}]} {
    %c0 = arith.constant 0 : index
    %c0_0 = arith.constant 0 : index
    %0 = vector.load %arg1[%c0, %c0_0] : memref<16x64xf32, #tpu.memory_space<vmem>>, vector<16x64xf32>
    %1 = arith.truncf %0 : vector<16x64xf32> to vector<16x64xbf16>
    %c0_1 = arith.constant 0 : index
    %c0_2 = arith.constant 0 : index
    %2 = vector.load %arg2[%c0_1, %c0_2] : memref<64x128xbf16, #tpu.memory_space<vmem>>, vector<64x128xbf16>
    %cst = arith.constant dense<0.000000e+00> : vector<16x128xf32>
    %3 = tpu.matmul %1, %2, %cst {dimension_numbers = #tpu.dot_dimension_numbers<[1], [0], [0], [1], [0, 0, 1, 1], [], []>} : vector<16x64xbf16>, vector<64x128xbf16>, vector<16x128xf32> -> vector<16x128xf32>
    %c0_3 = arith.constant 0 : index
    %c0_4 = arith.constant 0 : index
    %4 = vector.load %arg3[%c0_3, %c0_4] : memref<1x128xf32, #tpu.memory_space<vmem>>, vector<1x128xf32>
    %5 = vector.broadcast %4 : vector<1x128xf32> to vector<16x128xf32>
    %6 = arith.addf %3, %5 : vector<16x128xf32>
    %cst_5 = arith.constant 0.000000e+00 : f32
    %7 = vector.broadcast %cst_5 : f32 to vector<16x128xf32>
    %8 = arith.maximumf %6, %7 : vector<16x128xf32>
    %9 = arith.truncf %8 : vector<16x128xf32> to vector<16x128xbf16>
    %c0_6 = arith.constant 0 : index
    %c0_7 = arith.constant 0 : index
    %10 = vector.load %arg4[%c0_6, %c0_7] : memref<128x128xbf16, #tpu.memory_space<vmem>>, vector<128x128xbf16>
    %cst_8 = arith.constant dense<0.000000e+00> : vector<16x128xf32>
    %11 = tpu.matmul %9, %10, %cst_8 {dimension_numbers = #tpu.dot_dimension_numbers<[1], [0], [0], [1], [0, 0, 1, 1], [], []>} : vector<16x128xbf16>, vector<128x128xbf16>, vector<16x128xf32> -> vector<16x128xf32>
    %c0_9 = arith.constant 0 : index
    %c0_10 = arith.constant 0 : index
    %12 = vector.load %arg5[%c0_9, %c0_10] : memref<1x128xf32, #tpu.memory_space<vmem>>, vector<1x128xf32>
    %13 = vector.broadcast %12 : vector<1x128xf32> to vector<16x128xf32>
    %14 = arith.addf %11, %13 : vector<16x128xf32>
    %cst_11 = arith.constant 0.000000e+00 : f32
    %15 = vector.broadcast %cst_11 : f32 to vector<16x128xf32>
    %16 = arith.maximumf %14, %15 : vector<16x128xf32>
    %17 = arith.truncf %16 : vector<16x128xf32> to vector<16x128xbf16>
    %c0_12 = arith.constant 0 : index
    %c0_13 = arith.constant 0 : index
    %18 = vector.load %arg6[%c0_12, %c0_13] : memref<128x128xbf16, #tpu.memory_space<vmem>>, vector<128x128xbf16>
    %cst_14 = arith.constant dense<0.000000e+00> : vector<16x128xf32>
    %19 = tpu.matmul %17, %18, %cst_14 {dimension_numbers = #tpu.dot_dimension_numbers<[1], [0], [0], [1], [0, 0, 1, 1], [], []>} : vector<16x128xbf16>, vector<128x128xbf16>, vector<16x128xf32> -> vector<16x128xf32>
    %c0_15 = arith.constant 0 : index
    %c0_16 = arith.constant 0 : index
    %20 = vector.load %arg7[%c0_15, %c0_16] : memref<1x128xf32, #tpu.memory_space<vmem>>, vector<1x128xf32>
    %21 = vector.broadcast %20 : vector<1x128xf32> to vector<16x128xf32>
    %22 = arith.addf %19, %21 : vector<16x128xf32>
    %23 = arith.truncf %22 : vector<16x128xf32> to vector<16x128xbf16>
    %c0_17 = arith.constant 0 : index
    %c0_18 = arith.constant 0 : index
    %24 = vector.load %arg8[%c0_17, %c0_18] : memref<16x128xbf16, #tpu.memory_space<vmem>>, vector<16x128xbf16>
    tpu.vector_store %arg8[%c0_17, %c0_18], %23 {strides = array<i32>} : memref<16x128xbf16, #tpu.memory_space<vmem>>, vector<16x128xbf16>,
    return
  }
  func.func @transform_0(%arg0: i32) -> (i32, i32) {
    %c0_i32 = arith.constant 0 : i32
    %c0_i32_0 = arith.constant 0 : i32
    return %arg0, %c0_i32 : i32, i32
  }
  func.func @transform_1(%arg0: i32) -> (i32, i32) {
    %c0_i32 = arith.constant 0 : i32
    %c0_i32_0 = arith.constant 0 : i32
    %c0_i32_1 = arith.constant 0 : i32
    return %c0_i32, %c0_i32_0 : i32, i32
  }
  func.func @transform_2(%arg0: i32) -> (i32, i32) {
    %c0_i32 = arith.constant 0 : i32
    %c0_i32_0 = arith.constant 0 : i32
    %c0_i32_1 = arith.constant 0 : i32
    return %c0_i32, %c0_i32_0 : i32, i32
  }
  func.func @transform_3(%arg0: i32) -> (i32, i32) {
    %c0_i32 = arith.constant 0 : i32
    %c0_i32_0 = arith.constant 0 : i32
    %c0_i32_1 = arith.constant 0 : i32
    return %c0_i32, %c0_i32_0 : i32, i32
  }
  func.func @transform_4(%arg0: i32) -> (i32, i32) {
    %c0_i32 = arith.constant 0 : i32
    %c0_i32_0 = arith.constant 0 : i32
    %c0_i32_1 = arith.constant 0 : i32
    return %c0_i32, %c0_i32_0 : i32, i32
  }
  func.func @transform_5(%arg0: i32) -> (i32, i32) {
    %c0_i32 = arith.constant 0 : i32
    %c0_i32_0 = arith.constant 0 : i32
    %c0_i32_1 = arith.constant 0 : i32
    return %c0_i32, %c0_i32_0 : i32, i32
  }
  func.func @transform_6(%arg0: i32) -> (i32, i32) {
    %c0_i32 = arith.constant 0 : i32
    %c0_i32_0 = arith.constant 0 : i32
    %c0_i32_1 = arith.constant 0 : i32
    return %c0_i32, %c0_i32_0 : i32, i32
  }
  func.func @transform_7(%arg0: i32) -> (i32, i32) {
    %c0_i32 = arith.constant 0 : i32
    %c0_i32_0 = arith.constant 0 : i32
    return %arg0, %c0_i32 : i32, i32
  }
}

</mosaic_0001>

<llo_original>
// kernel: tpu_custom_call.1
$region0: #{tpu_custom_call.1}
  #allocation0 [shape = 'u32[]', space=smem, size = 0x4, offset = 0x4, fixed_abs, tag = 'smem constant byte address 0x4 - core index']
  #allocation1 [shape = 'u32[144,128]{1,0:T(1,128)}', space=vmem, size = 0x12000, scoped, tag = 'internal scratch']
  %s0 = inlined_call_operand.hbm [shape: f32[16,64], index: 0, kind: input, shape index: {}]
  %s1 = inlined_call_operand.hbm [shape: bf16[64,128], index: 1, kind: input, shape index: {}]
  %s2 = inlined_call_operand.vmem [shape: f32[1,128], index: 2, kind: input, shape index: {}]
  %s3 = inlined_call_operand.hbm [shape: bf16[128,128], index: 3, kind: input, shape index: {}]
  %s4 = inlined_call_operand.vmem [shape: f32[1,128], index: 4, kind: input, shape index: {}]
  %s5 = inlined_call_operand.hbm [shape: bf16[128,128], index: 5, kind: input, shape index: {}]
  %s6 = inlined_call_operand.vmem [shape: f32[1,128], index: 6, kind: input, shape index: {}]
  %s7 = inlined_call_operand.hbm [shape: bf16[16,128], index: 7, kind: output, shape index: {}]
  %s8 = sld [smem:[#allocation0]]
  $region54: #{tpu_custom_call.1} parent=0
    _
  %s10 = ssub.s32 1, %s8
  %s11 = scalar_select 0, %s10, %s8
  $region1: #{tpu_custom_call.1} parent=0
    #allocation2 [shape = 'u8[8192]{0}', space=vmem, size = 0x2000, scoped, tag = 'input window, operand 0, single buffered']
    #allocation3 [shape = 's32[1]{0}', space=sflag, size = 0x4, scoped, tag = 'scoped memory for tpu_custom_call.1']
    #allocation4 [shape = 's32[1]{0}', space=sflag, size = 0x4, scoped, tag = 'scoped memory for tpu_custom_call.1']
    #allocation5 [shape = 'u8[16384]{0}', space=vmem, size = 0x4000, scoped, tag = 'input window, operand 1, single buffered']
    #allocation6 [shape = 's32[1]{0}', space=sflag, size = 0x4, scoped, tag = 'scoped memory for tpu_custom_call.1']
    #allocation7 [shape = 'u8[32768]{0}', space=vmem, size = 0x8000, scoped, tag = 'input window, operand 3, single buffered']
    #allocation8 [shape = 'u8[32768]{0}', space=vmem, size = 0x8000, scoped, tag = 'input window, operand 5, single buffered']
    #allocation9 [shape = 's32[1]{0}', space=sflag, size = 0x4, scoped, tag = 'scoped memory for tpu_custom_call.1']
    #allocation10 [shape = 'u8[4096]{0}', space=vmem, size = 0x1000, scoped, tag = 'output window, operand 0, single buffered']
    %12 = vsyncpa [#allocation3], 0
    %13 = vsyncpa [#allocation6], 0
    %14 = vsyncpa [#allocation9], 0
    %15 = vsyncpa [#allocation4], 0
    // Predicated region
    $region2: #{tpu_custom_call.1} parent=1 // pred_check
      _
    $region3: #{tpu_custom_call.1} parent=1 // pred_check_branch
      %17 = sbr.rel (0) target = $region5
    $region4: #{tpu_custom_call.1} parent=1 // pred_region
      %s19 = ssub.s32 256, 256
      %20 = vsyncadd [#allocation3], %s19
      %s21 = sshll.u32 [#allocation2], 4
      %s22 = int_to_ptr.vmem [resolvable:$true] %s21
      %27 = dma.hbm_to_vmem [thread:$0]  %s0, 256, %s22, [#allocation3], 128, 128, 8
    $region5: #{tpu_custom_call.1} parent=1 // pred_fallthru
      _
    // Predicated region
    $region6: #{tpu_custom_call.1} parent=1 // pred_check
      _
    $region7: #{tpu_custom_call.1} parent=1 // pred_check_branch
      %29 = sbr.rel (0) target = $region9
    $region8: #{tpu_custom_call.1} parent=1 // pred_region
      %s31 = ssub.s32 512, 512
      %32 = vsyncadd [#allocation6], %s31
      %s33 = sshll.u32 [#allocation5], 4
      %s34 = int_to_ptr.vmem [resolvable:$true] %s33
      %39 = dma.hbm_to_vmem [thread:$0]  %s1, 512, %s34, [#allocation6], 64, 64, 4
    $region9: #{tpu_custom_call.1} parent=1 // pred_fallthru
      _
    // Predicated region
    $region10: #{tpu_custom_call.1} parent=1 // pred_check
      _
    $region11: #{tpu_custom_call.1} parent=1 // pred_check_branch
      %41 = sbr.rel (0) target = $region13
    $region12: #{tpu_custom_call.1} parent=1 // pred_region
      _
    $region13: #{tpu_custom_call.1} parent=1 // pred_fallthru
      _
    // Predicated region
    $region14: #{tpu_custom_call.1} parent=1 // pred_check
      _
    $region15: #{tpu_custom_call.1} parent=1 // pred_check_branch
      %43 = sbr.rel (0) target = $region17
    $region16: #{tpu_custom_call.1} parent=1 // pred_region
      %s45 = ssub.s32 1024, 1024
      %46 = vsyncadd [#allocation6], %s45
      %s47 = sshll.u32 [#allocation7], 4
      %s48 = int_to_ptr.vmem [resolvable:$true] %s47
      %53 = dma.hbm_to_vmem [thread:$0]  %s3, 1024, %s48, [#allocation6], 64, 64, 4
    $region17: #{tpu_custom_call.1} parent=1 // pred_fallthru
      _
    // Predicated region
    $region18: #{tpu_custom_call.1} parent=1 // pred_check
      _
    $region19: #{tpu_custom_call.1} parent=1 // pred_check_branch
      %55 = sbr.rel (0) target = $region21
    $region20: #{tpu_custom_call.1} parent=1 // pred_region
      _
    $region21: #{tpu_custom_call.1} parent=1 // pred_fallthru
      _
    // Predicated region
    $region22: #{tpu_custom_call.1} parent=1 // pred_check
      _
    $region23: #{tpu_custom_call.1} parent=1 // pred_check_branch
      %57 = sbr.rel (0) target = $region25
    $region24: #{tpu_custom_call.1} parent=1 // pred_region
      %s59 = ssub.s32 1024, 1024
      %60 = vsyncadd [#allocation9], %s59
      %s61 = sshll.u32 [#allocation8], 4
      %s62 = int_to_ptr.vmem [resolvable:$true] %s61
      %67 = dma.hbm_to_vmem [thread:$0]  %s5, 1024, %s62, [#allocation9], 64, 64, 4
    $region25: #{tpu_custom_call.1} parent=1 // pred_fallthru
      _
    // Predicated region
    $region26: #{tpu_custom_call.1} parent=1 // pred_check
      _
    $region27: #{tpu_custom_call.1} parent=1 // pred_check_branch
      %69 = sbr.rel (0) target = $region29
    $region28: #{tpu_custom_call.1} parent=1 // pred_region
      _
    $region29: #{tpu_custom_call.1} parent=1 // pred_fallthru
      _
    // Predicated region
    $region30: #{tpu_custom_call.1} parent=1 // pred_check
      _
    $region31: #{tpu_custom_call.1} parent=1 // pred_check_branch
      %71 = sbr.rel (0) target = $region33
    $region32: #{tpu_custom_call.1} parent=1 // pred_region
      %72 = dma.done [#allocation3], 256
    $region33: #{tpu_custom_call.1} parent=1 // pred_fallthru
      _
    // Predicated region
    $region34: #{tpu_custom_call.1} parent=1 // pred_check
      _
    $region35: #{tpu_custom_call.1} parent=1 // pred_check_branch
      %74 = sbr.rel (0) target = $region37
    $region36: #{tpu_custom_call.1} parent=1 // pred_region
      %75 = dma.done [#allocation6], 512
    $region37: #{tpu_custom_call.1} parent=1 // pred_fallthru
      _
    // Predicated region
    $region38: #{tpu_custom_call.1} parent=1 // pred_check
      _
    $region39: #{tpu_custom_call.1} parent=1 // pred_check_branch
      %77 = sbr.rel (0) target = $region41
    $region40: #{tpu_custom_call.1} parent=1 // pred_region
      %78 = dma.done [#allocation6], 1024
    $region41: #{tpu_custom_call.1} parent=1 // pred_fallthru
      _
    // Predicated region
    $region42: #{tpu_custom_call.1} parent=1 // pred_check
      _
    $region43: #{tpu_custom_call.1} parent=1 // pred_check_branch
      %80 = sbr.rel (0) target = $region45
    $region44: #{tpu_custom_call.1} parent=1 // pred_region
      %81 = dma.done [#allocation9], 1024
    $region45: #{tpu_custom_call.1} parent=1 // pred_fallthru
      _
    %v83 = vld [vmem:[#allocation2] sm:$0xff]
    %v84 = vld [vmem:[#allocation2 + $0x8] sm:$0xff]
    %v85 = vpack.c.bf16 %v84, %v83
    %v86 = vld [vmem:[#allocation5] sm:$0xf]
    %v87 = vld [vmem:[#allocation5 + $0x4] sm:$0xf]
    %v88 = vld [vmem:[#allocation5 + $0x8] sm:$0xf]
    %v89 = vld [vmem:[#allocation5 + $0xc] sm:$0xf]
    %v90 = vld [vmem:[#allocation5 + $0x10] sm:$0xf]
    %v91 = vld [vmem:[#allocation5 + $0x14] sm:$0xf]
    %v92 = vld [vmem:[#allocation5 + $0x18] sm:$0xf]
    %v93 = vld [vmem:[#allocation5 + $0x1c] sm:$0xf]
    %v94 = vld [vmem:[%s2] sm:$0x1]
    %v96 = vlaneseq
    %v97 = vshrl.u32 %v96, 7
    %v98 = vsub.s32 0, %v97
    %v99 = vrot.slane %v94, %v98
    %v109 = vunpack.c.l.b16 %v86
    %v110 = vunpack.c.l.b16 %v87
    %v111 = vunpack.c.l.b16 %v88
    %v112 = vunpack.c.l.b16 %v89
    %v113 = vunpack.c.l.b16 %v90
    %v114 = vunpack.c.l.b16 %v91
    %v115 = vunpack.c.l.b16 %v92
    %v116 = vunpack.c.l.b16 %v93
    %v117 = vpack.c.b16 %v110, %v109
    %v118 = vpack.c.b16 %v112, %v111
    %v119 = vpack.c.b16 %v114, %v113
    %v120 = vpack.c.b16 %v116, %v115
    %vm125 = vcmask 523264
    %v127 = vsel %vm125, %v85, 0
    %129 = vmatprep.subr.bf16.mxu0 0
    %130 = vmatpush1.bf16.msra.mxu0 0
    %131 = vmatprep.subr.bf16.mxu0 0
    %132 = vmatpush1.bf16.msra.mxu0 0
    %133 = vmatprep.subr.bf16.mxu0 0
    %134 = vmatpush1.bf16.msra.mxu0 0
    %135 = vmatprep.subr.bf16.mxu0 0
    %136 = vmatpush1.bf16.msra.mxu0 0
    %137 = vmatprep.subr.bf16.mxu0 0
    %138 = vmatpush1.bf16.msra.mxu0 %v120
    %139 = vmatprep.subr.bf16.mxu0 0
    %140 = vmatpush1.bf16.msra.mxu0 %v119
    %141 = vmatprep.subr.bf16.mxu0 0
    %142 = vmatpush1.bf16.msra.mxu0 %v118
    %143 = vmatprep.subr.bf16.mxu0 0
    %144 = vmatpush1.bf16.msra.mxu0 %v117
    %145 = vmatprep.subr.bf16.mxu0 0
    %146 = vmatpush2.bf16.msra.mxu0 0
    %147 = vmatprep.subr.bf16.mxu0 0
    %148 = vmatpush2.bf16.msra.mxu0 0
    %149 = vmatprep.subr.bf16.mxu0 0
    %150 = vmatpush2.bf16.msra.mxu0 0
    %151 = vmatprep.subr.bf16.mxu0 0
    %152 = vmatpush2.bf16.msra.mxu0 0
    %153 = vmatprep.subr.bf16.mxu0 0
    %154 = vmatpush2.bf16.msra.mxu0 0
    %155 = vmatprep.subr.bf16.mxu0 0
    %156 = vmatpush2.bf16.msra.mxu0 0
    %157 = vmatprep.subr.bf16.mxu0 0
    %158 = vmatpush2.bf16.msra.mxu0 0
    %159 = vmatprep.subr.bf16.mxu0 0
    %160 = vmatpush2.bf16.msra.mxu0 0
    %161 = vmatprep.mubr.bf16.mxu0 0
    %162 = vmatmul.mubr.bf16.gmra.mxu0 %v127
    %v163 = vpop.f32.mrf.mxu0
    %v164 = vadd.f32 %v99, %v163
    %v165 = vpop.f32.mrf.mxu0
    %v166 = vpop.f32.mrf.mxu0
    %v167 = vadd.f32 %v99, %v166
    %v168 = vpop.f32.mrf.mxu0
    %169 = vdwg.mxu0
    %v170 = vmax.f32 %v164, 0.0
    %v171 = vmax.f32 %v167, 0.0
    %v172 = vpack.c.bf16 %v171, %v170
    %v173 = vld [vmem:[#allocation7] sm:$0xf]
    %v174 = vld [vmem:[#allocation7 + $0x4] sm:$0xf]
    %v175 = vld [vmem:[#allocation7 + $0x8] sm:$0xf]
    %v176 = vld [vmem:[#allocation7 + $0xc] sm:$0xf]
    %v177 = vld [vmem:[#allocation7 + $0x10] sm:$0xf]
    %v178 = vld [vmem:[#allocation7 + $0x14] sm:$0xf]
    %v179 = vld [vmem:[#allocation7 + $0x18] sm:$0xf]
    %v180 = vld [vmem:[#allocation7 + $0x1c] sm:$0xf]
    %v181 = vld [vmem:[#allocation7 + $0x20] sm:$0xf]
    %v182 = vld [vmem:[#allocation7 + $0x24] sm:$0xf]
    %v183 = vld [vmem:[#allocation7 + $0x28] sm:$0xf]
    %v184 = vld [vmem:[#allocation7 + $0x2c] sm:$0xf]
    %v185 = vld [vmem:[#allocation7 + $0x30] sm:$0xf]
    %v186 = vld [vmem:[#allocation7 + $0x34] sm:$0xf]
    %v187 = vld [vmem:[#allocation7 + $0x38] sm:$0xf]
    %v188 = vld [vmem:[#allocation7 + $0x3c] sm:$0xf]
    %v189 = vld [vmem:[%s4] sm:$0x1]
    %v191 = vlaneseq
    %v192 = vshrl.u32 %v191, 7
    %v193 = vsub.s32 0, %v192
    %v194 = vrot.slane %v189, %v193
    %v212 = vunpack.c.l.b16 %v173
    %v213 = vunpack.c.l.b16 %v174
    %v214 = vunpack.c.l.b16 %v175
    %v215 = vunpack.c.l.b16 %v176
    %v216 = vunpack.c.l.b16 %v177
    %v217 = vunpack.c.l.b16 %v178
    %v218 = vunpack.c.l.b16 %v179
    %v219 = vunpack.c.l.b16 %v180
    %v220 = vunpack.c.l.b16 %v181
    %v221 = vunpack.c.l.b16 %v182
    %v222 = vunpack.c.l.b16 %v183
    %v223 = vunpack.c.l.b16 %v184
    %v224 = vunpack.c.l.b16 %v185
    %v225 = vunpack.c.l.b16 %v186
    %v226 = vunpack.c.l.b16 %v187
    %v227 = vunpack.c.l.b16 %v188
    %v228 = vpack.c.b16 %v213, %v212
    %v229 = vpack.c.b16 %v215, %v214
    %v230 = vpack.c.b16 %v217, %v216
    %v231 = vpack.c.b16 %v219, %v218
    %v232 = vpack.c.b16 %v221, %v220
    %v233 = vpack.c.b16 %v223, %v222
    %v234 = vpack.c.b16 %v225, %v224
    %v235 = vpack.c.b16 %v227, %v226
    %244 = vmatprep.subr.bf16.mxu0 0
    %245 = vmatpush1.bf16.msra.mxu0 %v235
    %246 = vmatprep.subr.bf16.mxu0 0
    %247 = vmatpush1.bf16.msra.mxu0 %v234
    %248 = vmatprep.subr.bf16.mxu0 0
    %249 = vmatpush1.bf16.msra.mxu0 %v233
    %250 = vmatprep.subr.bf16.mxu0 0
    %251 = vmatpush1.bf16.msra.mxu0 %v232
    %252 = vmatprep.subr.bf16.mxu0 0
    %253 = vmatpush1.bf16.msra.mxu0 %v231
    %254 = vmatprep.subr.bf16.mxu0 0
    %255 = vmatpush1.bf16.msra.mxu0 %v230
    %256 = vmatprep.subr.bf16.mxu0 0
    %257 = vmatpush1.bf16.msra.mxu0 %v229
    %258 = vmatprep.subr.bf16.mxu0 0
    %259 = vmatpush1.bf16.msra.mxu0 %v228
    %260 = vmatprep.subr.bf16.mxu0 0
    %261 = vmatpush2.bf16.msra.mxu0 0
    %262 = vmatprep.subr.bf16.mxu0 0
    %263 = vmatpush2.bf16.msra.mxu0 0
    %264 = vmatprep.subr.bf16.mxu0 0
    %265 = vmatpush2.bf16.msra.mxu0 0
    %266 = vmatprep.subr.bf16.mxu0 0
    %267 = vmatpush2.bf16.msra.mxu0 0
    %268 = vmatprep.subr.bf16.mxu0 0
    %269 = vmatpush2.bf16.msra.mxu0 0
    %270 = vmatprep.subr.bf16.mxu0 0
    %271 = vmatpush2.bf16.msra.mxu0 0
    %272 = vmatprep.subr.bf16.mxu0 0
    %273 = vmatpush2.bf16.msra.mxu0 0
    %274 = vmatprep.subr.bf16.mxu0 0
    %275 = vmatpush2.bf16.msra.mxu0 0
    %276 = vmatprep.mubr.bf16.mxu0 0
    %277 = vmatmul.mubr.bf16.gmra.mxu0 %v172
    %v278 = vpop.f32.mrf.mxu0
    %v279 = vadd.f32 %v194, %v278
    %v280 = vpop.f32.mrf.mxu0
    %v281 = vpop.f32.mrf.mxu0
    %v282 = vadd.f32 %v194, %v281
    %v283 = vpop.f32.mrf.mxu0
    %284 = vdwg.mxu0
    %v285 = vmax.f32 %v279, 0.0
    %v286 = vmax.f32 %v282, 0.0
    %v287 = vpack.c.bf16 %v286, %v285
    %v288 = vld [vmem:[#allocation8] sm:$0xf]
    %v289 = vld [vmem:[#allocation8 + $0x4] sm:$0xf]
    %v290 = vld [vmem:[#allocation8 + $0x8] sm:$0xf]
    %v291 = vld [vmem:[#allocation8 + $0xc] sm:$0xf]
    %v292 = vld [vmem:[#allocation8 + $0x10] sm:$0xf]
    %v293 = vld [vmem:[#allocation8 + $0x14] sm:$0xf]
    %v294 = vld [vmem:[#allocation8 + $0x18] sm:$0xf]
    %v295 = vld [vmem:[#allocation8 + $0x1c] sm:$0xf]
    %v296 = vld [vmem:[#allocation8 + $0x20] sm:$0xf]
    %v297 = vld [vmem:[#allocation8 + $0x24] sm:$0xf]
    %v298 = vld [vmem:[#allocation8 + $0x28] sm:$0xf]
    %v299 = vld [vmem:[#allocation8 + $0x2c] sm:$0xf]
    %v300 = vld [vmem:[#allocation8 + $0x30] sm:$0xf]
    %v301 = vld [vmem:[#allocation8 + $0x34] sm:$0xf]
    %v302 = vld [vmem:[#allocation8 + $0x38] sm:$0xf]
    %v303 = vld [vmem:[#allocation8 + $0x3c] sm:$0xf]
    %v304 = vld [vmem:[%s6] sm:$0x1]
    %v306 = vlaneseq
    %v307 = vshrl.u32 %v306, 7
    %v308 = vsub.s32 0, %v307
    %v309 = vrot.slane %v304, %v308
    %v327 = vunpack.c.l.b16 %v288
    %v328 = vunpack.c.l.b16 %v289
    %v329 = vunpack.c.l.b16 %v290
    %v330 = vunpack.c.l.b16 %v291
    %v331 = vunpack.c.l.b16 %v292
    %v332 = vunpack.c.l.b16 %v293
    %v333 = vunpack.c.l.b16 %v294
    %v334 = vunpack.c.l.b16 %v295
    %v335 = vunpack.c.l.b16 %v296
    %v336 = vunpack.c.l.b16 %v297
    %v337 = vunpack.c.l.b16 %v298
    %v338 = vunpack.c.l.b16 %v299
    %v339 = vunpack.c.l.b16 %v300
    %v340 = vunpack.c.l.b16 %v301
    %v341 = vunpack.c.l.b16 %v302
    %v342 = vunpack.c.l.b16 %v303
    %v343 = vpack.c.b16 %v328, %v327
    %v344 = vpack.c.b16 %v330, %v329
    %v345 = vpack.c.b16 %v332, %v331
    %v346 = vpack.c.b16 %v334, %v333
    %v347 = vpack.c.b16 %v336, %v335
    %v348 = vpack.c.b16 %v338, %v337
    %v349 = vpack.c.b16 %v340, %v339
    %v350 = vpack.c.b16 %v342, %v341
    %359 = vmatprep.subr.bf16.mxu0 0
    %360 = vmatpush1.bf16.msra.mxu0 %v350
    %361 = vmatprep.subr.bf16.mxu0 0
    %362 = vmatpush1.bf16.msra.mxu0 %v349
    %363 = vmatprep.subr.bf16.mxu0 0
    %364 = vmatpush1.bf16.msra.mxu0 %v348
    %365 = vmatprep.subr.bf16.mxu0 0
    %366 = vmatpush1.bf16.msra.mxu0 %v347
    %367 = vmatprep.subr.bf16.mxu0 0
    %368 = vmatpush1.bf16.msra.mxu0 %v346
    %369 = vmatprep.subr.bf16.mxu0 0
    %370 = vmatpush1.bf16.msra.mxu0 %v345
    %371 = vmatprep.subr.bf16.mxu0 0
    %372 = vmatpush1.bf16.msra.mxu0 %v344
    %373 = vmatprep.subr.bf16.mxu0 0
    %374 = vmatpush1.bf16.msra.mxu0 %v343
    %375 = vmatprep.subr.bf16.mxu0 0
    %376 = vmatpush2.bf16.msra.mxu0 0
    %377 = vmatprep.subr.bf16.mxu0 0
    %378 = vmatpush2.bf16.msra.mxu0 0
    %379 = vmatprep.subr.bf16.mxu0 0
    %380 = vmatpush2.bf16.msra.mxu0 0
    %381 = vmatprep.subr.bf16.mxu0 0
    %382 = vmatpush2.bf16.msra.mxu0 0
    %383 = vmatprep.subr.bf16.mxu0 0
    %384 = vmatpush2.bf16.msra.mxu0 0
    %385 = vmatprep.subr.bf16.mxu0 0
    %386 = vmatpush2.bf16.msra.mxu0 0
    %387 = vmatprep.subr.bf16.mxu0 0
    %388 = vmatpush2.bf16.msra.mxu0 0
    %389 = vmatprep.subr.bf16.mxu0 0
    %390 = vmatpush2.bf16.msra.mxu0 0
    %391 = vmatprep.mubr.bf16.mxu0 0
    %392 = vmatmul.mubr.bf16.gmra.mxu0 %v287
    %v393 = vpop.f32.mrf.mxu0
    %v394 = vadd.f32 %v309, %v393
    %v395 = vpop.f32.mrf.mxu0
    %v396 = vpop.f32.mrf.mxu0
    %v397 = vadd.f32 %v309, %v396
    %v398 = vpop.f32.mrf.mxu0
    %399 = vdwg.mxu0
    %v400 = vpack.c.bf16 %v397, %v394
    %v402 = vunpack.c.l.b16 %v400
    %v403 = vunpack.c.h.b16 %v400
    %v404 = vpack.c.b16 %v402, %v402
    %v405 = vpack.c.b16 %v403, %v403
    %408 = vst [vmem:[#allocation10] sm:$0xf] %v404
    %409 = vst [vmem:[#allocation10 + $0x4] sm:$0xf] %v405
    // Predicated region
    $region46: #{tpu_custom_call.1} parent=1 // pred_check
      _
    $region47: #{tpu_custom_call.1} parent=1 // pred_check_branch
      %411 = sbr.rel (0) target = $region49
    $region48: #{tpu_custom_call.1} parent=1 // pred_region
      %s413 = ssub.s32 128, 128
      %414 = vsyncadd [#allocation4], %s413
      %s415 = sshll.u32 [#allocation10], 4
      %s416 = int_to_ptr.vmem [resolvable:$true] %s415
      %421 = dma.vmem_to_hbm [thread:$0]  %s416, 128, %s7, [#allocation4], 64, 64, 4
    $region49: #{tpu_custom_call.1} parent=1 // pred_fallthru
      _
    // Predicated region
    $region50: #{tpu_custom_call.1} parent=1 // pred_check
      _
    $region51: #{tpu_custom_call.1} parent=1 // pred_check_branch
      %423 = sbr.rel (0) target = $region53
    $region52: #{tpu_custom_call.1} parent=1 // pred_region
      %424 = dma.done [#allocation4], 128
    $region53: #{tpu_custom_call.1} parent=1 // pred_fallthru
      _
    %425 = vsyncpa [#allocation3], 1
    %426 = vsyncpa [#allocation6], 1
    %427 = vsyncpa [#allocation9], 1
    %428 = vsyncpa [#allocation4], 1

</llo_original>
